<compile_context>
chip_gen: v7x
topology: tpu7x:2x2x1
jax: 0.10.0
libtpu: 0.0.40
codegen_flags: <defaults>
</compile_context>

<pallas_src>
import math
import functools

import jax
import jax.numpy as jnp
from jax.experimental import pallas as pl
from jax.experimental.pallas import tpu as pltpu


# ---------------------------------------------------------------------------
# helpers
# ---------------------------------------------------------------------------
def _pick_tile_m(m, target=256):
    """Largest row-tile <= target that divides m and is a multiple of 8.
    Falls back to the full extent (always a legal block shape)."""
    if m <= target:
        return m
    t = target - (target % 8)
    while t >= 8:
        if m % t == 0:
            return t
        t -= 8
    return m


def _erf(x):
    # Abramowitz & Stegun 7.1.26 rational approximation (max abs err ~1.5e-7).
    # Keeps nn.GELU's exact erf-based semantics to ~f32 precision while only
    # using ops with guaranteed Mosaic lowerings (exp / mul / add / where).
    a1, a2, a3, a4, a5 = (0.254829592, -0.284496736, 1.421413741,
                          -1.453152027, 1.061405429)
    p = 0.3275911
    ax = jnp.abs(x)
    t = 1.0 / (1.0 + p * ax)
    poly = ((((a5 * t + a4) * t + a3) * t + a2) * t + a1) * t
    y = 1.0 - poly * jnp.exp(-ax * ax)
    return jnp.where(x >= 0.0, y, -y)


def _gelu_exact(x):
    return 0.5 * x * (1.0 + _erf(x * (1.0 / math.sqrt(2.0))))


# ---------------------------------------------------------------------------
# kernel 1: fused LayerNorm + Linear (+ optional GELU)
# ---------------------------------------------------------------------------
def _ln_matmul_kernel(x_ref, g_ref, b_ref, w_ref, wb_ref, o_ref, *, eps, act):
    x = x_ref[...].astype(jnp.float32)                      # (TM, C)
    mu = jnp.mean(x, axis=-1, keepdims=True)
    xc = x - mu
    var = jnp.mean(xc * xc, axis=-1, keepdims=True)         # biased, like torch LN
    xn = xc * jax.lax.rsqrt(var + eps)
    h = xn * g_ref[...] + b_ref[...]                         # affine LN
    y = jnp.dot(h, w_ref[...], preferred_element_type=jnp.float32) + wb_ref[...]
    if act == "gelu":
        y = _gelu_exact(y)
    o_ref[...] = y.astype(o_ref.dtype)


def layernorm_linear(x2d, gamma, beta, w_in_out, bias, *, act="none",
                     eps=1e-5, tile_m=256):
    """y = act(LayerNorm(x2d) @ w_in_out + bias); x2d: (M, C), w: (C, OUT)."""
    M, C = x2d.shape
    OUT = w_in_out.shape[1]
    TM = _pick_tile_m(M, tile_m)
    gamma2 = gamma.reshape(1, C).astype(jnp.float32)
    beta2 = beta.reshape(1, C).astype(jnp.float32)
    bias2 = bias.reshape(1, OUT).astype(jnp.float32)
    kernel = functools.partial(_ln_matmul_kernel, eps=eps, act=act)
    flops = 2 * M * C * OUT
    trans = M * C + (M * OUT if act == "gelu" else 0)
    bytes_acc = 4 * (M * C + C * OUT + M * OUT + 2 * C + OUT)
    return pl.pallas_call(
        kernel,
        out_shape=jax.ShapeDtypeStruct((M, OUT), x2d.dtype),
        grid_spec=pltpu.PrefetchScalarGridSpec(
            num_scalar_prefetch=0,
            grid=(M // TM,),
            in_specs=[
                pl.BlockSpec((TM, C), lambda i: (i, 0)),
                pl.BlockSpec((1, C), lambda i: (0, 0)),
                pl.BlockSpec((1, C), lambda i: (0, 0)),
                pl.BlockSpec((C, OUT), lambda i: (0, 0)),
                pl.BlockSpec((1, OUT), lambda i: (0, 0)),
            ],
            out_specs=pl.BlockSpec((TM, OUT), lambda i: (i, 0)),
        ),
        compiler_params=pltpu.CompilerParams(
            dimension_semantics=("parallel",)),
        cost_estimate=pl.CostEstimate(flops=flops, transcendentals=trans,
                                      bytes_accessed=bytes_acc),
    )(x2d, gamma2, beta2, w_in_out, bias2)


# ---------------------------------------------------------------------------
# kernel 2: per-(batch, head) attention core
# ---------------------------------------------------------------------------
def _attention_kernel(q_ref, k_ref, v_ref, o_ref, *, scale):
    q = q_ref[0].astype(jnp.float32)                         # (N, D)
    k = k_ref[0].astype(jnp.float32)
    v = v_ref[0].astype(jnp.float32)
    # s = q @ k^T  (contract head_dim of both operands -> "NT" matmul on the MXU)
    s = jax.lax.dot_general(q, k, (((1,), (1,)), ((), ())),
                            preferred_element_type=jnp.float32) * scale
    s = s - jnp.max(s, axis=-1, keepdims=True)
    p = jnp.exp(s)
    p = p / jnp.sum(p, axis=-1, keepdims=True)
    o = jnp.dot(p, v, preferred_element_type=jnp.float32)
    o_ref[0] = o.astype(o_ref.dtype)


def attention_core(q, k, v, scale):
    """q, k, v: (B*H, N, D) -> (B*H, N, D); softmax(q k^T * scale) @ v per slice."""
    BH, N, D = q.shape
    kernel = functools.partial(_attention_kernel, scale=scale)
    flops = 4 * BH * N * N * D
    bytes_acc = 4 * 4 * BH * N * D
    return pl.pallas_call(
        kernel,
        out_shape=jax.ShapeDtypeStruct((BH, N, D), q.dtype),
        grid_spec=pltpu.PrefetchScalarGridSpec(
            num_scalar_prefetch=0,
            grid=(BH,),
            in_specs=[
                pl.BlockSpec((1, N, D), lambda i: (i, 0, 0)),
                pl.BlockSpec((1, N, D), lambda i: (i, 0, 0)),
                pl.BlockSpec((1, N, D), lambda i: (i, 0, 0)),
            ],
            out_specs=pl.BlockSpec((1, N, D), lambda i: (i, 0, 0)),
        ),
        compiler_params=pltpu.CompilerParams(
            dimension_semantics=("parallel",)),
        cost_estimate=pl.CostEstimate(flops=flops, transcendentals=BH * N * N,
                                      bytes_accessed=bytes_acc),
    )(q, k, v)


# ---------------------------------------------------------------------------
# kernel 3: Linear + bias + residual add
# ---------------------------------------------------------------------------
def _matmul_residual_kernel(y_ref, w_ref, b_ref, r_ref, o_ref):
    acc = jnp.dot(y_ref[...].astype(jnp.float32), w_ref[...],
                  preferred_element_type=jnp.float32)
    o_ref[...] = (acc + b_ref[...] + r_ref[...].astype(jnp.float32)
                  ).astype(o_ref.dtype)


def linear_residual(y2d, w_in_out, bias, residual2d, *, tile_m=256):
    """out = y2d @ w_in_out + bias + residual2d."""
    M, CIN = y2d.shape
    OUT = w_in_out.shape[1]
    TM = _pick_tile_m(M, tile_m)
    bias2 = bias.reshape(1, OUT).astype(jnp.float32)
    flops = 2 * M * CIN * OUT
    bytes_acc = 4 * (M * CIN + CIN * OUT + 2 * M * OUT + OUT)
    return pl.pallas_call(
        _matmul_residual_kernel,
        out_shape=jax.ShapeDtypeStruct((M, OUT), residual2d.dtype),
        grid_spec=pltpu.PrefetchScalarGridSpec(
            num_scalar_prefetch=0,
            grid=(M // TM,),
            in_specs=[
                pl.BlockSpec((TM, CIN), lambda i: (i, 0)),
                pl.BlockSpec((CIN, OUT), lambda i: (0, 0)),
                pl.BlockSpec((1, OUT), lambda i: (0, 0)),
                pl.BlockSpec((TM, OUT), lambda i: (i, 0)),
            ],
            out_specs=pl.BlockSpec((TM, OUT), lambda i: (i, 0)),
        ),
        compiler_params=pltpu.CompilerParams(
            dimension_semantics=("parallel",)),
        cost_estimate=pl.CostEstimate(flops=flops, transcendentals=0,
                                      bytes_accessed=bytes_acc),
    )(y2d, w_in_out, bias2, residual2d)


# ---------------------------------------------------------------------------
# full Block forward
# ---------------------------------------------------------------------------
def vit_block_forward(x, params, num_heads, *, eps=1e-5):
    """x: (B, N, C) float32.  Param layouts follow PyTorch (Linear: (out, in))."""
    B, N, C = x.shape
    assert C % num_heads == 0
    D = C // num_heads
    M = B * N
    x2d = x.reshape(M, C)

    qkv_b = params.get("qkv_b")
    if qkv_b is None:
        qkv_b = jnp.zeros((3 * C,), x.dtype)     # qkv_bias=False default

    # ---- attention branch: LN1 fused with the QKV projection ----
    qkv = layernorm_linear(x2d, params["norm1_w"], params["norm1_b"],
                           params["qkv_w"].T, qkv_b, act="none", eps=eps)
    # reshape(B,N,3,H,D).permute(2,0,3,1,4) — same split/ordering as torch.
    qkv = qkv.reshape(B, N, 3, num_heads, D).transpose(2, 0, 3, 1, 4)
    q = qkv[0].reshape(B * num_heads, N, D)
    k = qkv[1].reshape(B * num_heads, N, D)
    v = qkv[2].reshape(B * num_heads, N, D)

    scale = float(D) ** -0.5                      # qk_scale=None -> head_dim**-0.5
    o = attention_core(q, k, v, scale)            # (B*H, N, D)
    o = o.reshape(B, num_heads, N, D).transpose(0, 2, 1, 3).reshape(M, C)

    # attention output projection + first residual
    x2d = linear_residual(o, params["proj_w"].T, params["proj_b"], x2d)

    # ---- MLP branch: LN2 fused with fc1 + exact GELU ----
    h = layernorm_linear(x2d, params["norm2_w"], params["norm2_b"],
                         params["fc1_w"].T, params["fc1_b"], act="gelu", eps=eps)
    # fc2 + second residual
    out2d = linear_residual(h, params["fc2_w"].T, params["fc2_b"], x2d)
    return out2d.reshape(B, N, C)


# ---------------------------------------------------------------------------
# pure-JAX reference (mirrors the PyTorch module)
# ---------------------------------------------------------------------------
def _block_reference(x, params, num_heads, eps=1e-5):
    B, N, C = x.shape
    D = C // num_heads

    def ln(t, w, b):
        mu = t.mean(-1, keepdims=True)
        var = ((t - mu) ** 2).mean(-1, keepdims=True)
        return (t - mu) * jax.lax.rsqrt(var + eps) * w + b

    qkv_b = params.get("qkv_b")
    if qkv_b is None:
        qkv_b = jnp.zeros((3 * C,), x.dtype)

    h = ln(x, params["norm1_w"], params["norm1_b"])
    qkv = h @ params["qkv_w"].T + qkv_b
    qkv = qkv.reshape(B, N, 3, num_heads, D).transpose(2, 0, 3, 1, 4)
    q, k, v = qkv[0], qkv[1], qkv[2]
    attn = jnp.einsum("bhqd,bhkd->bhqk", q, k) * (float(D) ** -0.5)
    attn = jax.nn.softmax(attn, axis=-1)
    o = jnp.einsum("bhqk,bhkd->bhqd", attn, v)
    o = o.transpose(0, 2, 1, 3).reshape(B, N, C)
    x = x + (o @ params["proj_w"].T + params["proj_b"])
    h = ln(x, params["norm2_w"], params["norm2_b"])
    h = jax.nn.gelu(h @ params["fc1_w"].T + params["fc1_b"], approximate=False)
    x = x + (h @ params["fc2_w"].T + params["fc2_b"])
    return x


if __name__ == "__main__":
    # Small config consistent with Block: batch=2, seq=8, dim=32, heads=4, mlp_ratio=4
    B, N, C = 2, 8, 32
    num_heads = 4
    hidden = int(C * 4.0)

    key = jax.random.PRNGKey(0)
    ks = jax.random.split(key, 13)

    def rnd(k, shape, s=0.05):
        return jax.random.normal(k, shape, dtype=jnp.float32) * s

    x = jax.random.normal(ks[0], (B, N, C), dtype=jnp.float32)
    params = {
        "norm1_w": jnp.ones((C,), jnp.float32) + rnd(ks[1], (C,)),
        "norm1_b": rnd(ks[2], (C,)),
        "qkv_w": rnd(ks[3], (3 * C, C)),
        "qkv_b": rnd(ks[4], (3 * C,)),
        "proj_w": rnd(ks[5], (C, C)),
        "proj_b": rnd(ks[6], (C,)),
        "norm2_w": jnp.ones((C,), jnp.float32) + rnd(ks[7], (C,)),
        "norm2_b": rnd(ks[8], (C,)),
        "fc1_w": rnd(ks[9], (hidden, C)),
        "fc1_b": rnd(ks[10], (hidden,)),
        "fc2_w": rnd(ks[11], (C, hidden)),
        "fc2_b": rnd(ks[12], (C,)),
    }

    out = vit_block_forward(x, params, num_heads)
    out = jax.block_until_ready(out)

    ref = _block_reference(x, params, num_heads)
    ref = jax.block_until_ready(ref)

    assert out.shape == (B, N, C)
    max_diff = float(jnp.max(jnp.abs(out - ref)))
    assert jnp.allclose(out, ref, atol=2e-3, rtol=2e-3), max_diff

    print("KERNEL_OK")
</pallas_src>

<mosaic_0001>
module attributes {stable_mosaic.version = 11 : i64} {
  func.func @_ln_matmul_kernel(%arg0: i32, %arg1: memref<16x32xf32, #tpu.memory_space<vmem>>, %arg2: memref<1x32xf32, #tpu.memory_space<vmem>>, %arg3: memref<1x32xf32, #tpu.memory_space<vmem>>, %arg4: memref<32x96xf32, #tpu.memory_space<vmem>>, %arg5: memref<1x96xf32, #tpu.memory_space<vmem>>, %arg6: memref<16x96xf32, #tpu.memory_space<vmem>>) attributes {dimension_semantics = [#tpu.dimension_semantics<parallel>], iteration_bounds = array<i64: 1>, scalar_prefetch = 0 : i64, scratch_operands = 0 : i64, tpu.core_type = #tpu.core_type<tc>, window_params = [{transform_indices = @transform_0, window_bounds = array<i64: 16, 32>}, {pipeline_mode = #tpu.pipeline_mode<synchronous>, transform_indices = @transform_1, window_bounds = array<i64: 1, 32>}, {pipeline_mode = #tpu.pipeline_mode<synchronous>, transform_indices = @transform_2, window_bounds = array<i64: 1, 32>}, {pipeline_mode = #tpu.pipeline_mode<synchronous>, transform_indices = @transform_3, window_bounds = array<i64: 32, 96>}, {pipeline_mode = #tpu.pipeline_mode<synchronous>, transform_indices = @transform_4, window_bounds = array<i64: 1, 96>}, {transform_indices = @transform_5, window_bounds = array<i64: 16, 96>}]} {
    %c0 = arith.constant 0 : index
    %c0_0 = arith.constant 0 : index
    %0 = vector.load %arg1[%c0, %c0_0] : memref<16x32xf32, #tpu.memory_space<vmem>>, vector<16x32xf32>
    %cst = arith.constant dense<0.000000e+00> : vector<16xf32>
    %1 = vector.multi_reduction <add>, %0, %cst [1] : vector<16x32xf32> to vector<16xf32>
    %2 = vector.shape_cast %1 : vector<16xf32> to vector<16x1xf32>
    %cst_1 = arith.constant 3.200000e+01 : f32
    %3 = vector.broadcast %cst_1 : f32 to vector<16x1xf32>
    %4 = arith.divf %2, %3 : vector<16x1xf32>
    %5 = vector.broadcast %4 : vector<16x1xf32> to vector<16x32xf32>
    %6 = arith.subf %0, %5 : vector<16x32xf32>
    %7 = arith.mulf %6, %6 : vector<16x32xf32>
    %cst_2 = arith.constant dense<0.000000e+00> : vector<16xf32>
    %8 = vector.multi_reduction <add>, %7, %cst_2 [1] : vector<16x32xf32> to vector<16xf32>
    %9 = vector.shape_cast %8 : vector<16xf32> to vector<16x1xf32>
    %cst_3 = arith.constant 3.200000e+01 : f32
    %10 = vector.broadcast %cst_3 : f32 to vector<16x1xf32>
    %11 = arith.divf %9, %10 : vector<16x1xf32>
    %cst_4 = arith.constant 9.99999974E-6 : f32
    %12 = vector.broadcast %cst_4 : f32 to vector<16x1xf32>
    %13 = arith.addf %11, %12 : vector<16x1xf32>
    %14 = math.rsqrt %13 : vector<16x1xf32>
    %15 = vector.broadcast %14 : vector<16x1xf32> to vector<16x32xf32>
    %16 = arith.mulf %6, %15 : vector<16x32xf32>
    %c0_5 = arith.constant 0 : index
    %c0_6 = arith.constant 0 : index
    %17 = vector.load %arg2[%c0_5, %c0_6] : memref<1x32xf32, #tpu.memory_space<vmem>>, vector<1x32xf32>
    %18 = vector.broadcast %17 : vector<1x32xf32> to vector<16x32xf32>
    %19 = arith.mulf %16, %18 : vector<16x32xf32>
    %c0_7 = arith.constant 0 : index
    %c0_8 = arith.constant 0 : index
    %20 = vector.load %arg3[%c0_7, %c0_8] : memref<1x32xf32, #tpu.memory_space<vmem>>, vector<1x32xf32>
    %21 = vector.broadcast %20 : vector<1x32xf32> to vector<16x32xf32>
    %22 = arith.addf %19, %21 : vector<16x32xf32>
    %c0_9 = arith.constant 0 : index
    %c0_10 = arith.constant 0 : index
    %23 = vector.load %arg4[%c0_9, %c0_10] : memref<32x96xf32, #tpu.memory_space<vmem>>, vector<32x96xf32>
    %cst_11 = arith.constant dense<0.000000e+00> : vector<16x96xf32>
    %24 = tpu.matmul %22, %23, %cst_11 {dimension_numbers = #tpu.dot_dimension_numbers<[1], [0], [0], [1], [0, 0, 1, 1], [], []>} : vector<16x32xf32>, vector<32x96xf32>, vector<16x96xf32> -> vector<16x96xf32>
    %c0_12 = arith.constant 0 : index
    %c0_13 = arith.constant 0 : index
    %25 = vector.load %arg5[%c0_12, %c0_13] : memref<1x96xf32, #tpu.memory_space<vmem>>, vector<1x96xf32>
    %26 = vector.broadcast %25 : vector<1x96xf32> to vector<16x96xf32>
    %27 = arith.addf %24, %26 : vector<16x96xf32>
    %c0_14 = arith.constant 0 : index
    %c0_15 = arith.constant 0 : index
    %28 = vector.load %arg6[%c0_14, %c0_15] : memref<16x96xf32, #tpu.memory_space<vmem>>, vector<16x96xf32>
    tpu.vector_store %arg6[%c0_14, %c0_15], %27 {strides = array<i32>} : memref<16x96xf32, #tpu.memory_space<vmem>>, vector<16x96xf32>,
    return
  }
  func.func @transform_0(%arg0: i32) -> (i32, i32) {
    %c0_i32 = arith.constant 0 : i32
    %c0_i32_0 = arith.constant 0 : i32
    return %arg0, %c0_i32 : i32, i32
  }
  func.func @transform_1(%arg0: i32) -> (i32, i32) {
    %c0_i32 = arith.constant 0 : i32
    %c0_i32_0 = arith.constant 0 : i32
    %c0_i32_1 = arith.constant 0 : i32
    return %c0_i32, %c0_i32_0 : i32, i32
  }
  func.func @transform_2(%arg0: i32) -> (i32, i32) {
    %c0_i32 = arith.constant 0 : i32
    %c0_i32_0 = arith.constant 0 : i32
    %c0_i32_1 = arith.constant 0 : i32
    return %c0_i32, %c0_i32_0 : i32, i32
  }
  func.func @transform_3(%arg0: i32) -> (i32, i32) {
    %c0_i32 = arith.constant 0 : i32
    %c0_i32_0 = arith.constant 0 : i32
    %c0_i32_1 = arith.constant 0 : i32
    return %c0_i32, %c0_i32_0 : i32, i32
  }
  func.func @transform_4(%arg0: i32) -> (i32, i32) {
    %c0_i32 = arith.constant 0 : i32
    %c0_i32_0 = arith.constant 0 : i32
    %c0_i32_1 = arith.constant 0 : i32
    return %c0_i32, %c0_i32_0 : i32, i32
  }
  func.func @transform_5(%arg0: i32) -> (i32, i32) {
    %c0_i32 = arith.constant 0 : i32
    %c0_i32_0 = arith.constant 0 : i32
    return %arg0, %c0_i32 : i32, i32
  }
}

</mosaic_0001>

<llo_original>
// kernel: tpu_custom_call.1
$region0: #{tpu_custom_call.1}
  #allocation0 [shape = 'u32[]', space=smem, size = 0x4, offset = 0x4, fixed_abs, tag = 'smem constant byte address 0x4 - core index']
  #allocation1 [shape = 'u32[144,128]{1,0:T(1,128)}', space=vmem, size = 0x12000, scoped, tag = 'internal scratch']
  %s0 = inlined_call_operand.hbm [shape: f32[16,32], index: 0, kind: input, shape index: {}]
  %s1 = inlined_call_operand.vmem [shape: f32[1,32], index: 1, kind: input, shape index: {}]
  %s2 = inlined_call_operand.vmem [shape: f32[1,32], index: 2, kind: input, shape index: {}]
  %s3 = inlined_call_operand.hbm [shape: f32[32,96], index: 3, kind: input, shape index: {}]
  %s4 = inlined_call_operand.vmem [shape: f32[1,96], index: 4, kind: input, shape index: {}]
  %s5 = inlined_call_operand.hbm [shape: f32[16,96], index: 5, kind: output, shape index: {}]
  %s6 = sld [smem:[#allocation0]]
  $region38: #{tpu_custom_call.1} parent=0
    _
  %s8 = ssub.s32 1, %s6
  %s9 = scalar_select 0, %s8, %s6
  $region1: #{tpu_custom_call.1} parent=0
    #allocation2 [shape = 'u8[8192]{0}', space=vmem, size = 0x2000, scoped, tag = 'input window, operand 0, single buffered']
    #allocation3 [shape = 's32[1]{0}', space=sflag, size = 0x4, scoped, tag = 'scoped memory for tpu_custom_call.1']
    #allocation4 [shape = 's32[1]{0}', space=sflag, size = 0x4, scoped, tag = 'scoped memory for tpu_custom_call.1']
    #allocation5 [shape = 'u8[16384]{0}', space=vmem, size = 0x4000, scoped, tag = 'input window, operand 3, single buffered']
    #allocation6 [shape = 's32[1]{0}', space=sflag, size = 0x4, scoped, tag = 'scoped memory for tpu_custom_call.1']
    #allocation7 [shape = 'u8[8192]{0}', space=vmem, size = 0x2000, scoped, tag = 'output window, operand 0, single buffered']
    %10 = vsyncpa [#allocation3], 0
    %11 = vsyncpa [#allocation6], 0
    %12 = vsyncpa [#allocation4], 0
    // Predicated region
    $region2: #{tpu_custom_call.1} parent=1 // pred_check
      _
    $region3: #{tpu_custom_call.1} parent=1 // pred_check_branch
      %14 = sbr.rel (0) target = $region5
    $region4: #{tpu_custom_call.1} parent=1 // pred_region
      %s16 = ssub.s32 256, 256
      %17 = vsyncadd [#allocation3], %s16
      %s18 = sshll.u32 [#allocation2], 4
      %s19 = int_to_ptr.vmem [resolvable:$true] %s18
      %24 = dma.hbm_to_vmem [thread:$0]  %s0, 256, %s19, [#allocation3], 128, 128, 8
    $region5: #{tpu_custom_call.1} parent=1 // pred_fallthru
      _
    // Predicated region
    $region6: #{tpu_custom_call.1} parent=1 // pred_check
      _
    $region7: #{tpu_custom_call.1} parent=1 // pred_check_branch
      %26 = sbr.rel (0) target = $region9
    $region8: #{tpu_custom_call.1} parent=1 // pred_region
      _
    $region9: #{tpu_custom_call.1} parent=1 // pred_fallthru
      _
    // Predicated region
    $region10: #{tpu_custom_call.1} parent=1 // pred_check
      _
    $region11: #{tpu_custom_call.1} parent=1 // pred_check_branch
      %28 = sbr.rel (0) target = $region13
    $region12: #{tpu_custom_call.1} parent=1 // pred_region
      _
    $region13: #{tpu_custom_call.1} parent=1 // pred_fallthru
      _
    // Predicated region
    $region14: #{tpu_custom_call.1} parent=1 // pred_check
      _
    $region15: #{tpu_custom_call.1} parent=1 // pred_check_branch
      %30 = sbr.rel (0) target = $region17
    $region16: #{tpu_custom_call.1} parent=1 // pred_region
      %s32 = ssub.s32 512, 512
      %33 = vsyncadd [#allocation6], %s32
      %s34 = sshll.u32 [#allocation5], 4
      %s35 = int_to_ptr.vmem [resolvable:$true] %s34
      %40 = dma.hbm_to_vmem [thread:$0]  %s3, 512, %s35, [#allocation6], 128, 128, 8
    $region17: #{tpu_custom_call.1} parent=1 // pred_fallthru
      _
    // Predicated region
    $region18: #{tpu_custom_call.1} parent=1 // pred_check
      _
    $region19: #{tpu_custom_call.1} parent=1 // pred_check_branch
      %42 = sbr.rel (0) target = $region21
    $region20: #{tpu_custom_call.1} parent=1 // pred_region
      _
    $region21: #{tpu_custom_call.1} parent=1 // pred_fallthru
      _
    // Predicated region
    $region22: #{tpu_custom_call.1} parent=1 // pred_check
      _
    $region23: #{tpu_custom_call.1} parent=1 // pred_check_branch
      %44 = sbr.rel (0) target = $region25
    $region24: #{tpu_custom_call.1} parent=1 // pred_region
      %45 = dma.done [#allocation3], 256
    $region25: #{tpu_custom_call.1} parent=1 // pred_fallthru
      _
    // Predicated region
    $region26: #{tpu_custom_call.1} parent=1 // pred_check
      _
    $region27: #{tpu_custom_call.1} parent=1 // pred_check_branch
      %47 = sbr.rel (0) target = $region29
    $region28: #{tpu_custom_call.1} parent=1 // pred_region
      %48 = dma.done [#allocation6], 512
    $region29: #{tpu_custom_call.1} parent=1 // pred_fallthru
      _
    %v49 = vld [vmem:[#allocation2] sm:$0xff]
    %v50 = vld [vmem:[#allocation2 + $0x8] sm:$0xff]
    %vm51 = vcmask 261120
    %v52 = vsel %vm51, %v49, 0.0
    %53 = vadd.xlane.f32.xlu0 %v52
    %v54 = vpop.xlane.xlu0 %53
    %v55 = vsel %vm51, %v50, 0.0
    %56 = vadd.xlane.f32.xlu0 %v55
    %v57 = vpop.xlane.xlu0 %56
    %v58 = vrcp.pop 32.0
    %v59 = vmul.f32 %v54, %v58
    %v60 = vmul.f32 %v57, %v58
    %v61 = vsub.f32 %v49, %v59
    %v62 = vsub.f32 %v50, %v60
    %v63 = vmul.f32 %v61, %v61
    %v64 = vmul.f32 %v62, %v62
    %v65 = vsel %vm51, %v63, 0.0
    %66 = vadd.xlane.f32.xlu0 %v65
    %v67 = vpop.xlane.xlu0 %66
    %v68 = vsel %vm51, %v64, 0.0
    %69 = vadd.xlane.f32.xlu0 %v68
    %v70 = vpop.xlane.xlu0 %69
    %v71 = vmul.f32 %v67, %v58
    %v72 = vmul.f32 %v70, %v58
    %v73 = vadd.f32 %v71, 1e-05
    %v74 = vadd.f32 %v72, 1e-05
    %v75 = vrsqrt.pop %v73
    %v76 = vrsqrt.pop %v74
    %v77 = vmul.f32 %v61, %v75
    %v78 = vmul.f32 %v62, %v76
    %v79 = vld [vmem:[%s1] sm:$0x1]
    %v81 = vlaneseq
    %v82 = vshrl.u32 %v81, 7
    %v83 = vsub.s32 0, %v82
    %v84 = vrot.slane %v79, %v83
    %v86 = vmul.f32 %v77, %v84
    %v87 = vmul.f32 %v78, %v84
    %v88 = vld [vmem:[%s2] sm:$0x1]
    %v90 = vlaneseq
    %v91 = vshrl.u32 %v90, 7
    %v92 = vsub.s32 0, %v91
    %v93 = vrot.slane %v88, %v92
    %v95 = vadd.f32 %v86, %v93
    %v96 = vadd.f32 %v87, %v93
    %v97 = vld [vmem:[#allocation5] sm:$0xff]
    %v98 = vld [vmem:[#allocation5 + $0x8] sm:$0xff]
    %v99 = vld [vmem:[#allocation5 + $0x10] sm:$0xff]
    %v100 = vld [vmem:[#allocation5 + $0x18] sm:$0xff]
    %v101 = vld [vmem:[%s4] sm:$0x1]
    %v103 = vlaneseq
    %v104 = vshrl.u32 %v103, 7
    %v105 = vsub.s32 0, %v104
    %v106 = vrot.slane %v101, %v105
    %v109 = vsel %vm51, %v95, 0
    %v112 = vsel %vm51, %v96, 0
    %114 = vmatprep.subr.mxu0 0.0
    %115 = vmatpush1.msra.mxu0 %v97
    %116 = vmatprep.subr.mxu0 0.0
    %117 = vmatpush1.msra.mxu0 %v98
    %118 = vmatprep.subr.mxu0 0.0
    %119 = vmatpush1.msra.mxu0 %v99
    %120 = vmatprep.subr.mxu0 0.0
    %121 = vmatpush1.msra.mxu0 %v100
    %122 = vmatprep.subr.mxu0 0.0
    %123 = vmatpush1.msra.mxu0 0.0
    %124 = vmatprep.subr.mxu0 0.0
    %125 = vmatpush1.msra.mxu0 0.0
    %126 = vmatprep.subr.mxu0 0.0
    %127 = vmatpush1.msra.mxu0 0.0
    %128 = vmatprep.subr.mxu0 0.0
    %129 = vmatpush1.msra.mxu0 0.0
    %130 = vmatprep.subr.mxu0 0.0
    %131 = vmatpush1.msra.mxu0 0.0
    %132 = vmatprep.subr.mxu0 0.0
    %133 = vmatpush1.msra.mxu0 0.0
    %134 = vmatprep.subr.mxu0 0.0
    %135 = vmatpush1.msra.mxu0 0.0
    %136 = vmatprep.subr.mxu0 0.0
    %137 = vmatpush1.msra.mxu0 0.0
    %138 = vmatprep.subr.mxu0 0.0
    %139 = vmatpush1.msra.mxu0 0.0
    %140 = vmatprep.subr.mxu0 0.0
    %141 = vmatpush1.msra.mxu0 0.0
    %142 = vmatprep.subr.mxu0 0.0
    %143 = vmatpush1.msra.mxu0 0.0
    %144 = vmatprep.subr.mxu0 0.0
    %145 = vmatpush1.msra.mxu0 0.0
    %146 = vmatprep.subr.mxu0 0.0
    %147 = vmatpush1.msra.mxu0 0.0
    %148 = vmatprep.subr.mxu0 0.0
    %149 = vmatpush1.msra.mxu0 0.0
    %150 = vmatprep.subr.mxu0 0.0
    %151 = vmatpush1.msra.mxu0 0.0
    %152 = vmatprep.subr.mxu0 0.0
    %153 = vmatpush1.msra.mxu0 0.0
    %154 = vmatprep.subr.mxu0 0.0
    %155 = vmatpush1.msra.mxu0 0.0
    %156 = vmatprep.subr.mxu0 0.0
    %157 = vmatpush1.msra.mxu0 0.0
    %158 = vmatprep.subr.mxu0 0.0
    %159 = vmatpush1.msra.mxu0 0.0
    %160 = vmatprep.subr.mxu0 0.0
    %161 = vmatpush1.msra.mxu0 0.0
    %162 = vmatprep.subr.mxu0 0.0
    %163 = vmatpush1.msra.mxu0 0.0
    %164 = vmatprep.subr.mxu0 0.0
    %165 = vmatpush1.msra.mxu0 0.0
    %166 = vmatprep.subr.mxu0 0.0
    %167 = vmatpush1.msra.mxu0 0.0
    %168 = vmatprep.subr.mxu0 0.0
    %169 = vmatpush1.msra.mxu0 0.0
    %170 = vmatprep.subr.mxu0 0.0
    %171 = vmatpush1.msra.mxu0 0.0
    %172 = vmatprep.subr.mxu0 0.0
    %173 = vmatpush1.msra.mxu0 0.0
    %174 = vmatprep.subr.mxu0 0.0
    %175 = vmatpush1.msra.mxu0 0.0
    %176 = vmatprep.subr.mxu0 0.0
    %177 = vmatpush1.msra.mxu0 0.0
    %178 = vmatprep.mubr.f32.mxu0 0.0
    %179 = vmatmul.mubr.f32.gmra.mrb[0].mxu0 %v109
    %v180 = vpop.f32.mrb[0].mxu0
    %v181 = vadd.f32 %v106, %v180
    %v182 = vpop.f32.mrb[0].mxu0
    %183 = vmatprep.mubr.f32.mxu0 0.0
    %184 = vmatmul.mubr.f32.gmra.mrb[0].mxu0 %v112
    %v185 = vpop.f32.mrb[0].mxu0
    %v186 = vadd.f32 %v106, %v185
    %v187 = vpop.f32.mrb[0].mxu0
    %188 = vdwg.mxu0
    %vm189 = vcmask 785408
    %190 = vst.msk [vmem:[#allocation7] sm:$0xff] %vm189, %v181
    %191 = vst.msk [vmem:[#allocation7 + $0x8] sm:$0xff] %vm189, %v186
    // Predicated region
    $region30: #{tpu_custom_call.1} parent=1 // pred_check
      _
    $region31: #{tpu_custom_call.1} parent=1 // pred_check_branch
      %193 = sbr.rel (0) target = $region33
    $region32: #{tpu_custom_call.1} parent=1 // pred_region
      %s195 = ssub.s32 256, 256
      %196 = vsyncadd [#allocation4], %s195
      %s197 = sshll.u32 [#allocation7], 4
      %s198 = int_to_ptr.vmem [resolvable:$true] %s197
      %203 = dma.vmem_to_hbm [thread:$0]  %s198, 256, %s5, [#allocation4], 128, 128, 8
    $region33: #{tpu_custom_call.1} parent=1 // pred_fallthru
      _
    // Predicated region
    $region34: #{tpu_custom_call.1} parent=1 // pred_check
      _
    $region35: #{tpu_custom_call.1} parent=1 // pred_check_branch
      %205 = sbr.rel (0) target = $region37
    $region36: #{tpu_custom_call.1} parent=1 // pred_region
      %206 = dma.done [#allocation4], 256
    $region37: #{tpu_custom_call.1} parent=1 // pred_fallthru
      _
    %207 = vsyncpa [#allocation3], 1
    %208 = vsyncpa [#allocation6], 1
    %209 = vsyncpa [#allocation4], 1

</llo_original>
